<compile_context>
chip_gen: v5e
topology: v5e:2x2
jax: 0.10.0
libtpu: 0.0.40
codegen_flags: <defaults>
</compile_context>

<pallas_src>
import jax
import jax.numpy as jnp
from jax.experimental import pallas as pl
from jax.experimental.pallas import tpu as pltpu


def _explainer_kernel(ids_ref, emb_ref, w1_ref, b1_ref, w2_ref, b2_ref,
                      w3_ref, b3_ref, out_ref):
    """One tile of tokens: one-hot MXU embedding gather + fused 3-layer MLP.

    All activations are feature-major (feature, T): T is the lane axis.
    """
    ids = ids_ref[...]                                        # (1, T) int32
    tile_t = ids.shape[1]
    vocab = emb_ref.shape[1]                                  # emb_ref: (D, V)

    # One-hot built transposed, (V, T): id row broadcasts along sublanes,
    # values (0/1) are exact in bf16.
    vocab_iota = jax.lax.broadcasted_iota(jnp.int32, (vocab, tile_t), 0)
    one_hot = (vocab_iota == ids).astype(jnp.bfloat16)        # (V, T)

    # Embedding gather: (D, V) @ (V, T) -> (D, T), f32 accumulate.
    e = jnp.dot(emb_ref[...], one_hot,
                preferred_element_type=jnp.float32)           # (D, T) f32

    # Layer 1: (H, D) @ (D, T) -> (H, T); bias/ReLU in f32.
    h = jnp.dot(w1_ref[...], e.astype(jnp.bfloat16),
                preferred_element_type=jnp.float32) + b1_ref[...]
    h = jnp.maximum(h, 0.0)

    # Layer 2: (H, H) @ (H, T) -> (H, T).
    h = jnp.dot(w2_ref[...], h.astype(jnp.bfloat16),
                preferred_element_type=jnp.float32) + b2_ref[...]
    h = jnp.maximum(h, 0.0)

    # Layer 3: (C, H) @ (H, T) -> (C, T): lane-dense output block.
    out = jnp.dot(w3_ref[...], h.astype(jnp.bfloat16),
                  preferred_element_type=jnp.float32) + b3_ref[...]
    out_ref[...] = out.astype(out_ref.dtype)                  # (C, T)


def explainer_forward(x, emb, w1, b1, w2, b2, w3, b3, *, tile_tokens=1024):
    """Pallas implementation of Explainer.forward(x).

    x: (B, L) int token ids; returns (B, C, L) float32 (== torch.swapaxes(W, 1, 2)).
    """
    B, L = x.shape
    V, D = emb.shape
    H = w1.shape[1]
    C = w3.shape[1]
    n = B * L

    def ceil_to(a, m):
        return ((a + m - 1) // m) * m

    # Token tile: multiple of 128 (lane-dense output / id blocks), capped at
    # tile_tokens, and small enough to give the parallel grid >= 2 steps when
    # there is enough work (v7x megacore; harmless on v5e/v6e).
    n128 = ceil_to(n, 128)
    tile = min(tile_tokens, n128)
    if n128 >= 2 * 128:
        tile = min(tile, ceil_to(n128 // 2, 128))
    tile = max(128, (tile // 128) * 128)
    n_pad = ceil_to(n, tile)
    grid = (n_pad // tile,)

    # Token ids, lane-dense (1, n_pad); padded rows use token 0 and are sliced off.
    ids = jnp.zeros((1, n_pad), jnp.int32).at[0, :n].set(
        x.reshape(-1).astype(jnp.int32))

    # Transpose weights once (tiny, outside the kernel) so every in-kernel
    # matmul is canonical (feature, K) @ (K, T); cast MXU operands to bf16.
    emb_t = emb.T.astype(jnp.bfloat16)          # (D, V)
    w1_t = w1.T.astype(jnp.bfloat16)            # (H, D)
    w2_t = w2.T.astype(jnp.bfloat16)            # (H, H)
    w3_t = w3.T.astype(jnp.bfloat16)            # (C, H)
    b1c = b1.reshape(H, 1).astype(jnp.float32)
    b2c = b2.reshape(H, 1).astype(jnp.float32)
    b3c = b3.reshape(C, 1).astype(jnp.float32)

    out = pl.pallas_call(
        _explainer_kernel,
        out_shape=jax.ShapeDtypeStruct((C, n_pad), jnp.float32),
        grid=grid,
        in_specs=[
            pl.BlockSpec((1, tile), lambda i: (0, i)),   # ids (lane-dense)
            pl.BlockSpec((D, V), lambda i: (0, 0)),      # emb^T (resident)
            pl.BlockSpec((H, D), lambda i: (0, 0)),      # W1^T
            pl.BlockSpec((H, 1), lambda i: (0, 0)),      # b1
            pl.BlockSpec((H, H), lambda i: (0, 0)),      # W2^T
            pl.BlockSpec((H, 1), lambda i: (0, 0)),      # b2
            pl.BlockSpec((C, H), lambda i: (0, 0)),      # W3^T
            pl.BlockSpec((C, 1), lambda i: (0, 0)),      # b3
        ],
        out_specs=pl.BlockSpec((C, tile), lambda i: (0, i)),
        compiler_params=pltpu.CompilerParams(
            dimension_semantics=("parallel",)),
    )(ids, emb_t, w1_t, b1c, w2_t, b2c, w3_t, b3c)

    # (C, n) -> (C, B, L) -> (B, C, L)  (== torch.swapaxes of the (B, L, C) result).
    w_cbl = out[:, :n].reshape(C, B, L)
    return jnp.transpose(w_cbl, (1, 0, 2))


if __name__ == "__main__":
    key = jax.random.PRNGKey(0)
    V, D, C, H = 50, 32, 4, 32
    B, L = 2, 8

    k = jax.random.split(key, 8)
    x = jax.random.randint(k[0], (B, L), 0, V, dtype=jnp.int32)
    emb = jax.random.normal(k[1], (V, D), jnp.float32)
    w1 = jax.random.normal(k[2], (D, H), jnp.float32) * 0.1
    b1 = jax.random.normal(k[3], (H,), jnp.float32) * 0.1
    w2 = jax.random.normal(k[4], (H, H), jnp.float32) * 0.1
    b2 = jax.random.normal(k[5], (H,), jnp.float32) * 0.1
    w3 = jax.random.normal(k[6], (H, C), jnp.float32) * 0.1
    b3 = jax.random.normal(k[7], (C,), jnp.float32) * 0.1

    out = explainer_forward(x, emb, w1, b1, w2, b2, w3, b3)
    out = jax.block_until_ready(out)

    # Pure-JAX f32 reference of the PyTorch forward pass.
    e_ref = emb[x]                                       # (B, L, D)
    h_ref = jnp.maximum(e_ref @ w1 + b1, 0.0)
    h_ref = jnp.maximum(h_ref @ w2 + b2, 0.0)
    ref = jnp.swapaxes(h_ref @ w3 + b3, 1, 2)            # (B, C, L)

    assert out.shape == (B, C, L)
    assert bool(jnp.all(jnp.isfinite(out)))
    # Kernel uses bf16 MXU operands with f32 accumulate -> small, bounded error.
    assert bool(jnp.allclose(out, ref, atol=1e-2, rtol=1e-2))
    print("KERNEL_OK")
</pallas_src>

<mosaic_0001>
module attributes {stable_mosaic.version = 11 : i64} {
  func.func @_explainer_kernel(%arg0: i32, %arg1: memref<1x128xi32, #tpu.memory_space<vmem>>, %arg2: memref<32x50xbf16, #tpu.memory_space<vmem>>, %arg3: memref<32x32xbf16, #tpu.memory_space<vmem>>, %arg4: memref<32x1xf32, #tpu.memory_space<vmem>>, %arg5: memref<32x32xbf16, #tpu.memory_space<vmem>>, %arg6: memref<32x1xf32, #tpu.memory_space<vmem>>, %arg7: memref<4x32xbf16, #tpu.memory_space<vmem>>, %arg8: memref<4x1xf32, #tpu.memory_space<vmem>>, %arg9: memref<4x128xf32, #tpu.memory_space<vmem>>) attributes {dimension_semantics = [#tpu.dimension_semantics<parallel>], iteration_bounds = array<i64: 1>, scalar_prefetch = 0 : i64, scratch_operands = 0 : i64, tpu.core_type = #tpu.core_type<tc>, window_params = [{transform_indices = @transform_0, window_bounds = array<i64: 1, 128>}, {pipeline_mode = #tpu.pipeline_mode<synchronous>, transform_indices = @transform_1, window_bounds = array<i64: 32, 50>}, {pipeline_mode = #tpu.pipeline_mode<synchronous>, transform_indices = @transform_2, window_bounds = array<i64: 32, 32>}, {pipeline_mode = #tpu.pipeline_mode<synchronous>, transform_indices = @transform_3, window_bounds = array<i64: 32, 1>}, {pipeline_mode = #tpu.pipeline_mode<synchronous>, transform_indices = @transform_4, window_bounds = array<i64: 32, 32>}, {pipeline_mode = #tpu.pipeline_mode<synchronous>, transform_indices = @transform_5, window_bounds = array<i64: 32, 1>}, {pipeline_mode = #tpu.pipeline_mode<synchronous>, transform_indices = @transform_6, window_bounds = array<i64: 4, 32>}, {pipeline_mode = #tpu.pipeline_mode<synchronous>, transform_indices = @transform_7, window_bounds = array<i64: 4, 1>}, {transform_indices = @transform_8, window_bounds = array<i64: 4, 128>}]} {
    %c0 = arith.constant 0 : index
    %c0_0 = arith.constant 0 : index
    %0 = vector.load %arg1[%c0, %c0_0] : memref<1x128xi32, #tpu.memory_space<vmem>>, vector<1x128xi32>
    %1 = tpu.iota {dimensions = array<i32: 0>} : vector<50x128xi32>
    %2 = vector.broadcast %0 : vector<1x128xi32> to vector<50x128xi32>
    %3 = arith.cmpi eq, %1, %2 : vector<50x128xi32>
    %4 = arith.extui %3 : vector<50x128xi1> to vector<50x128xi32>
    %5 = arith.sitofp %4 : vector<50x128xi32> to vector<50x128xf32>
    %6 = arith.truncf %5 : vector<50x128xf32> to vector<50x128xbf16>
    %c0_1 = arith.constant 0 : index
    %c0_2 = arith.constant 0 : index
    %7 = vector.load %arg2[%c0_1, %c0_2] : memref<32x50xbf16, #tpu.memory_space<vmem>>, vector<32x50xbf16>
    %cst = arith.constant dense<0.000000e+00> : vector<32x128xf32>
    %8 = tpu.matmul %7, %6, %cst {dimension_numbers = #tpu.dot_dimension_numbers<[1], [0], [0], [1], [0, 0, 1, 1], [], []>} : vector<32x50xbf16>, vector<50x128xbf16>, vector<32x128xf32> -> vector<32x128xf32>
    %c0_3 = arith.constant 0 : index
    %c0_4 = arith.constant 0 : index
    %9 = vector.load %arg3[%c0_3, %c0_4] : memref<32x32xbf16, #tpu.memory_space<vmem>>, vector<32x32xbf16>
    %10 = arith.truncf %8 : vector<32x128xf32> to vector<32x128xbf16>
    %cst_5 = arith.constant dense<0.000000e+00> : vector<32x128xf32>
    %11 = tpu.matmul %9, %10, %cst_5 {dimension_numbers = #tpu.dot_dimension_numbers<[1], [0], [0], [1], [0, 0, 1, 1], [], []>} : vector<32x32xbf16>, vector<32x128xbf16>, vector<32x128xf32> -> vector<32x128xf32>
    %c0_6 = arith.constant 0 : index
    %c0_7 = arith.constant 0 : index
    %12 = vector.load %arg4[%c0_6, %c0_7] : memref<32x1xf32, #tpu.memory_space<vmem>>, vector<32x1xf32>
    %13 = vector.broadcast %12 : vector<32x1xf32> to vector<32x128xf32>
    %14 = arith.addf %11, %13 : vector<32x128xf32>
    %cst_8 = arith.constant 0.000000e+00 : f32
    %15 = vector.broadcast %cst_8 : f32 to vector<32x128xf32>
    %16 = arith.maximumf %14, %15 : vector<32x128xf32>
    %c0_9 = arith.constant 0 : index
    %c0_10 = arith.constant 0 : index
    %17 = vector.load %arg5[%c0_9, %c0_10] : memref<32x32xbf16, #tpu.memory_space<vmem>>, vector<32x32xbf16>
    %18 = arith.truncf %16 : vector<32x128xf32> to vector<32x128xbf16>
    %cst_11 = arith.constant dense<0.000000e+00> : vector<32x128xf32>
    %19 = tpu.matmul %17, %18, %cst_11 {dimension_numbers = #tpu.dot_dimension_numbers<[1], [0], [0], [1], [0, 0, 1, 1], [], []>} : vector<32x32xbf16>, vector<32x128xbf16>, vector<32x128xf32> -> vector<32x128xf32>
    %c0_12 = arith.constant 0 : index
    %c0_13 = arith.constant 0 : index
    %20 = vector.load %arg6[%c0_12, %c0_13] : memref<32x1xf32, #tpu.memory_space<vmem>>, vector<32x1xf32>
    %21 = vector.broadcast %20 : vector<32x1xf32> to vector<32x128xf32>
    %22 = arith.addf %19, %21 : vector<32x128xf32>
    %cst_14 = arith.constant 0.000000e+00 : f32
    %23 = vector.broadcast %cst_14 : f32 to vector<32x128xf32>
    %24 = arith.maximumf %22, %23 : vector<32x128xf32>
    %c0_15 = arith.constant 0 : index
    %c0_16 = arith.constant 0 : index
    %25 = vector.load %arg7[%c0_15, %c0_16] : memref<4x32xbf16, #tpu.memory_space<vmem>>, vector<4x32xbf16>
    %26 = arith.truncf %24 : vector<32x128xf32> to vector<32x128xbf16>
    %cst_17 = arith.constant dense<0.000000e+00> : vector<4x128xf32>
    %27 = tpu.matmul %25, %26, %cst_17 {dimension_numbers = #tpu.dot_dimension_numbers<[1], [0], [0], [1], [0, 0, 1, 1], [], []>} : vector<4x32xbf16>, vector<32x128xbf16>, vector<4x128xf32> -> vector<4x128xf32>
    %c0_18 = arith.constant 0 : index
    %c0_19 = arith.constant 0 : index
    %28 = vector.load %arg8[%c0_18, %c0_19] : memref<4x1xf32, #tpu.memory_space<vmem>>, vector<4x1xf32>
    %29 = vector.broadcast %28 : vector<4x1xf32> to vector<4x128xf32>
    %30 = arith.addf %27, %29 : vector<4x128xf32>
    %c0_20 = arith.constant 0 : index
    %c0_21 = arith.constant 0 : index
    %31 = vector.load %arg9[%c0_20, %c0_21] : memref<4x128xf32, #tpu.memory_space<vmem>>, vector<4x128xf32>
    tpu.vector_store %arg9[%c0_20, %c0_21], %30 {strides = array<i32>} : memref<4x128xf32, #tpu.memory_space<vmem>>, vector<4x128xf32>,
    return
  }
  func.func @transform_0(%arg0: i32) -> (i32, i32) {
    %c0_i32 = arith.constant 0 : i32
    %c0_i32_0 = arith.constant 0 : i32
    return %c0_i32, %arg0 : i32, i32
  }
  func.func @transform_1(%arg0: i32) -> (i32, i32) {
    %c0_i32 = arith.constant 0 : i32
    %c0_i32_0 = arith.constant 0 : i32
    %c0_i32_1 = arith.constant 0 : i32
    return %c0_i32, %c0_i32_0 : i32, i32
  }
  func.func @transform_2(%arg0: i32) -> (i32, i32) {
    %c0_i32 = arith.constant 0 : i32
    %c0_i32_0 = arith.constant 0 : i32
    %c0_i32_1 = arith.constant 0 : i32
    return %c0_i32, %c0_i32_0 : i32, i32
  }
  func.func @transform_3(%arg0: i32) -> (i32, i32) {
    %c0_i32 = arith.constant 0 : i32
    %c0_i32_0 = arith.constant 0 : i32
    %c0_i32_1 = arith.constant 0 : i32
    return %c0_i32, %c0_i32_0 : i32, i32
  }
  func.func @transform_4(%arg0: i32) -> (i32, i32) {
    %c0_i32 = arith.constant 0 : i32
    %c0_i32_0 = arith.constant 0 : i32
    %c0_i32_1 = arith.constant 0 : i32
    return %c0_i32, %c0_i32_0 : i32, i32
  }
  func.func @transform_5(%arg0: i32) -> (i32, i32) {
    %c0_i32 = arith.constant 0 : i32
    %c0_i32_0 = arith.constant 0 : i32
    %c0_i32_1 = arith.constant 0 : i32
    return %c0_i32, %c0_i32_0 : i32, i32
  }
  func.func @transform_6(%arg0: i32) -> (i32, i32) {
    %c0_i32 = arith.constant 0 : i32
    %c0_i32_0 = arith.constant 0 : i32
    %c0_i32_1 = arith.constant 0 : i32
    return %c0_i32, %c0_i32_0 : i32, i32
  }
  func.func @transform_7(%arg0: i32) -> (i32, i32) {
    %c0_i32 = arith.constant 0 : i32
    %c0_i32_0 = arith.constant 0 : i32
    %c0_i32_1 = arith.constant 0 : i32
    return %c0_i32, %c0_i32_0 : i32, i32
  }
  func.func @transform_8(%arg0: i32) -> (i32, i32) {
    %c0_i32 = arith.constant 0 : i32
    %c0_i32_0 = arith.constant 0 : i32
    return %c0_i32, %arg0 : i32, i32
  }
}

</mosaic_0001>

<llo_original>
// kernel: tpu_custom_call.1
$region0: #{tpu_custom_call.1}
  #allocation0 [shape = 'u32[]', space=smem, size = 0x4, offset = 0x4, fixed_abs, tag = 'smem constant byte address 0x4 - core index']
  #allocation1 [shape = 'u32[72,128]{1,0:T(1,128)}', space=vmem, size = 0x9000, scoped, tag = 'internal scratch']
  %s0 = inlined_call_operand.vmem [shape: s32[1,128], index: 0, kind: input, shape index: {}]
  %s1 = inlined_call_operand.vmem [shape: bf16[32,50], index: 1, kind: input, shape index: {}]
  %s2 = inlined_call_operand.vmem [shape: bf16[32,32], index: 2, kind: input, shape index: {}]
  %s3 = inlined_call_operand.vmem [shape: f32[32,1], index: 3, kind: input, shape index: {}]
  %s4 = inlined_call_operand.vmem [shape: bf16[32,32], index: 4, kind: input, shape index: {}]
  %s5 = inlined_call_operand.vmem [shape: f32[32,1], index: 5, kind: input, shape index: {}]
  %s6 = inlined_call_operand.vmem [shape: bf16[4,32], index: 6, kind: input, shape index: {}]
  %s7 = inlined_call_operand.vmem [shape: f32[4,1], index: 7, kind: input, shape index: {}]
  %s8 = inlined_call_operand.hbm [shape: f32[4,128], index: 8, kind: output, shape index: {}]
  %s9 = sld [smem:[#allocation0]]
  $region42: #{tpu_custom_call.1} parent=0
    _
  %s11 = ssub.s32 1, %s9
  %s12 = scalar_select 0, %s11, %s9
  $region1: #{tpu_custom_call.1} parent=0
    #allocation2 [shape = 'u8[2048]{0}', space=vmem, size = 0x800, scoped, tag = 'output window, operand 0, single buffered']
    #allocation3 [shape = 's32[1]{0}', space=sflag, size = 0x4, scoped, tag = 'scoped memory for tpu_custom_call.1']
    %13 = vsyncpa [#allocation3], 0
    // Predicated region
    $region2: #{tpu_custom_call.1} parent=1 // pred_check
      _
    $region3: #{tpu_custom_call.1} parent=1 // pred_check_branch
      %15 = sbr.rel (0) target = $region5
    $region4: #{tpu_custom_call.1} parent=1 // pred_region
      _
    $region5: #{tpu_custom_call.1} parent=1 // pred_fallthru
      _
    // Predicated region
    $region6: #{tpu_custom_call.1} parent=1 // pred_check
      _
    $region7: #{tpu_custom_call.1} parent=1 // pred_check_branch
      %17 = sbr.rel (0) target = $region9
    $region8: #{tpu_custom_call.1} parent=1 // pred_region
      _
    $region9: #{tpu_custom_call.1} parent=1 // pred_fallthru
      _
    // Predicated region
    $region10: #{tpu_custom_call.1} parent=1 // pred_check
      _
    $region11: #{tpu_custom_call.1} parent=1 // pred_check_branch
      %19 = sbr.rel (0) target = $region13
    $region12: #{tpu_custom_call.1} parent=1 // pred_region
      _
    $region13: #{tpu_custom_call.1} parent=1 // pred_fallthru
      _
    // Predicated region
    $region14: #{tpu_custom_call.1} parent=1 // pred_check
      _
    $region15: #{tpu_custom_call.1} parent=1 // pred_check_branch
      %21 = sbr.rel (0) target = $region17
    $region16: #{tpu_custom_call.1} parent=1 // pred_region
      _
    $region17: #{tpu_custom_call.1} parent=1 // pred_fallthru
      _
    // Predicated region
    $region18: #{tpu_custom_call.1} parent=1 // pred_check
      _
    $region19: #{tpu_custom_call.1} parent=1 // pred_check_branch
      %23 = sbr.rel (0) target = $region21
    $region20: #{tpu_custom_call.1} parent=1 // pred_region
      _
    $region21: #{tpu_custom_call.1} parent=1 // pred_fallthru
      _
    // Predicated region
    $region22: #{tpu_custom_call.1} parent=1 // pred_check
      _
    $region23: #{tpu_custom_call.1} parent=1 // pred_check_branch
      %25 = sbr.rel (0) target = $region25
    $region24: #{tpu_custom_call.1} parent=1 // pred_region
      _
    $region25: #{tpu_custom_call.1} parent=1 // pred_fallthru
      _
    // Predicated region
    $region26: #{tpu_custom_call.1} parent=1 // pred_check
      _
    $region27: #{tpu_custom_call.1} parent=1 // pred_check_branch
      %27 = sbr.rel (0) target = $region29
    $region28: #{tpu_custom_call.1} parent=1 // pred_region
      _
    $region29: #{tpu_custom_call.1} parent=1 // pred_fallthru
      _
    // Predicated region
    $region30: #{tpu_custom_call.1} parent=1 // pred_check
      _
    $region31: #{tpu_custom_call.1} parent=1 // pred_check_branch
      %29 = sbr.rel (0) target = $region33
    $region32: #{tpu_custom_call.1} parent=1 // pred_region
      _
    $region33: #{tpu_custom_call.1} parent=1 // pred_fallthru
      _
    %v31 = vld [vmem:[%s0] sm:$0x1]
    %v32 = vlaneseq
    %v33 = vshrl.u32 %v32, 7
    %v34 = vadd.s32 %v33, 8
    %v35 = vadd.s32 %v33, 16
    %v36 = vadd.s32 %v33, 24
    %v37 = vadd.s32 %v33, 32
    %v38 = vadd.s32 %v33, 40
    %v39 = vadd.s32 %v33, 48
    %v40 = vperm.slane %v31, 0
    %vm41 = vcmp.eq.s32.totalorder %v33, %v40
    %vm42 = vcmp.eq.s32.totalorder %v34, %v40
    %vm43 = vcmp.eq.s32.totalorder %v35, %v40
    %vm44 = vcmp.eq.s32.totalorder %v36, %v40
    %vm45 = vcmp.eq.s32.totalorder %v37, %v40
    %vm46 = vcmp.eq.s32.totalorder %v38, %v40
    %vm47 = vcmp.eq.s32.totalorder %v39, %v40
    %v48 = vsel %vm41, 1, 0
    %v49 = vsel %vm42, 1, 0
    %v50 = vsel %vm43, 1, 0
    %v51 = vsel %vm44, 1, 0
    %v52 = vsel %vm45, 1, 0
    %v53 = vsel %vm46, 1, 0
    %v54 = vsel %vm47, 1, 0
    %v55 = vcvt.s32.f32 %v48
    %v56 = vcvt.s32.f32 %v49
    %v57 = vcvt.s32.f32 %v50
    %v58 = vcvt.s32.f32 %v51
    %v59 = vcvt.s32.f32 %v52
    %v60 = vcvt.s32.f32 %v53
    %v61 = vcvt.s32.f32 %v54
    %v62 = vpack.c.bf16 %v56, %v55
    %v63 = vpack.c.bf16 %v58, %v57
    %v64 = vpack.c.bf16 %v60, %v59
    %v65 = vpack.c.bf16 %v61, %v61
    %v66 = vld [vmem:[%s1] sm:$0xf]
    %v67 = vld [vmem:[%s1 + $0x4] sm:$0xf]
    %v68 = vld [vmem:[%s1 + $0x8] sm:$0xf]
    %v69 = vld [vmem:[%s1 + $0xc] sm:$0xf]
    %v74 = vunpack.c.l.b16 %v66
    %v75 = vunpack.c.l.b16 %v67
    %v76 = vunpack.c.l.b16 %v68
    %v77 = vunpack.c.l.b16 %v69
    %v78 = vpack.c.b16 %v75, %v74
    %v79 = vpack.c.b16 %v77, %v76
    %vm80 = vcmask 408576
    %v82 = vsel %vm80, %v78, 0
    %v85 = vsel %vm80, %v79, 0
    %vm87 = vcmask 1040384
    %v89 = vsel %vm87, %v65, 0
    %91 = vmatpush.bf16.msra.mxu0 0
    %92 = vmatpush.bf16.msra.mxu0 0
    %93 = vmatpush.bf16.msra.mxu0 0
    %94 = vmatpush.bf16.msra.mxu0 0
    %95 = vmatpush.bf16.msra.mxu0 %v89
    %96 = vmatpush.bf16.msra.mxu0 %v64
    %97 = vmatpush.bf16.msra.mxu0 %v63
    %98 = vmatpush.bf16.msra.mxu0 %v62
    %99 = vmatmul.bf16.gmra.mxu0 %v82
    %v100 = vpop.f32.mrf.mxu0
    %v101 = vadd.f32 0.0, %v100
    %v102 = vpop.f32.mrf.mxu0
    %v103 = vadd.f32 0.0, %v102
    %104 = vmatmul.bf16.gmra.mxu0 %v85
    %v105 = vpop.f32.mrf.mxu0
    %v106 = vadd.f32 0.0, %v105
    %v107 = vpop.f32.mrf.mxu0
    %v108 = vadd.f32 0.0, %v107
    %109 = vdwg.mxu0
    %v110 = vld [vmem:[%s2] sm:$0xf]
    %v111 = vld [vmem:[%s2 + $0x4] sm:$0xf]
    %v112 = vld [vmem:[%s2 + $0x8] sm:$0xf]
    %v113 = vld [vmem:[%s2 + $0xc] sm:$0xf]
    %v114 = vpack.c.bf16 %v103, %v101
    %v115 = vpack.c.bf16 %v108, %v106
    %v116 = vld [vmem:[%s3] sm:$0xff]
    %v117 = vld [vmem:[%s3 + $0x8] sm:$0xff]
    %v118 = vld [vmem:[%s3 + $0x10] sm:$0xff]
    %v119 = vld [vmem:[%s3 + $0x18] sm:$0xff]
    %121 = vset.pattern.permute.xlu0 0
    %122 = vperm.xlu0 %121, %v116
    %v123 = vpop.permute.xlu0 %122
    %126 = vset.pattern.permute.xlu0 0
    %127 = vperm.xlu0 %126, %v117
    %v128 = vpop.permute.xlu0 %127
    %131 = vset.pattern.permute.xlu0 0
    %132 = vperm.xlu0 %131, %v118
    %v133 = vpop.permute.xlu0 %132
    %136 = vset.pattern.permute.xlu0 0
    %137 = vperm.xlu0 %136, %v119
    %v138 = vpop.permute.xlu0 %137
    %v144 = vunpack.c.l.b16 %v110
    %v145 = vunpack.c.l.b16 %v111
    %v146 = vunpack.c.l.b16 %v112
    %v147 = vunpack.c.l.b16 %v113
    %v148 = vpack.c.b16 %v145, %v144
    %v149 = vpack.c.b16 %v147, %v146
    %vm150 = vcmask 261120
    %v152 = vsel %vm150, %v148, 0
    %v155 = vsel %vm150, %v149, 0
    %157 = vmatpush.bf16.msra.mxu0 0
    %158 = vmatpush.bf16.msra.mxu0 0
    %159 = vmatpush.bf16.msra.mxu0 0
    %160 = vmatpush.bf16.msra.mxu0 0
    %161 = vmatpush.bf16.msra.mxu0 0
    %162 = vmatpush.bf16.msra.mxu0 0
    %163 = vmatpush.bf16.msra.mxu0 %v115
    %164 = vmatpush.bf16.msra.mxu0 %v114
    %165 = vmatmul.bf16.gmra.mxu0 %v152
    %v166 = vpop.f32.mrf.mxu0
    %v167 = vadd.f32 %v123, %v166
    %v168 = vpop.f32.mrf.mxu0
    %v169 = vadd.f32 %v128, %v168
    %170 = vmatmul.bf16.gmra.mxu0 %v155
    %v171 = vpop.f32.mrf.mxu0
    %v172 = vadd.f32 %v133, %v171
    %v173 = vpop.f32.mrf.mxu0
    %v174 = vadd.f32 %v138, %v173
    %175 = vdwg.mxu0
    %v176 = vmax.f32 %v167, 0.0
    %v177 = vmax.f32 %v169, 0.0
    %v178 = vmax.f32 %v172, 0.0
    %v179 = vmax.f32 %v174, 0.0
    %v180 = vld [vmem:[%s4] sm:$0xf]
    %v181 = vld [vmem:[%s4 + $0x4] sm:$0xf]
    %v182 = vld [vmem:[%s4 + $0x8] sm:$0xf]
    %v183 = vld [vmem:[%s4 + $0xc] sm:$0xf]
    %v184 = vpack.c.bf16 %v177, %v176
    %v185 = vpack.c.bf16 %v179, %v178
    %v186 = vld [vmem:[%s5] sm:$0xff]
    %v187 = vld [vmem:[%s5 + $0x8] sm:$0xff]
    %v188 = vld [vmem:[%s5 + $0x10] sm:$0xff]
    %v189 = vld [vmem:[%s5 + $0x18] sm:$0xff]
    %191 = vset.pattern.permute.xlu0 0
    %192 = vperm.xlu0 %191, %v186
    %v193 = vpop.permute.xlu0 %192
    %196 = vset.pattern.permute.xlu0 0
    %197 = vperm.xlu0 %196, %v187
    %v198 = vpop.permute.xlu0 %197
    %201 = vset.pattern.permute.xlu0 0
    %202 = vperm.xlu0 %201, %v188
    %v203 = vpop.permute.xlu0 %202
    %206 = vset.pattern.permute.xlu0 0
    %207 = vperm.xlu0 %206, %v189
    %v208 = vpop.permute.xlu0 %207
    %v214 = vunpack.c.l.b16 %v180
    %v215 = vunpack.c.l.b16 %v181
    %v216 = vunpack.c.l.b16 %v182
    %v217 = vunpack.c.l.b16 %v183
    %v218 = vpack.c.b16 %v215, %v214
    %v219 = vpack.c.b16 %v217, %v216
    %v221 = vsel %vm150, %v218, 0
    %v224 = vsel %vm150, %v219, 0
    %226 = vmatpush.bf16.msra.mxu0 0
    %227 = vmatpush.bf16.msra.mxu0 0
    %228 = vmatpush.bf16.msra.mxu0 0
    %229 = vmatpush.bf16.msra.mxu0 0
    %230 = vmatpush.bf16.msra.mxu0 0
    %231 = vmatpush.bf16.msra.mxu0 0
    %232 = vmatpush.bf16.msra.mxu0 %v185
    %233 = vmatpush.bf16.msra.mxu0 %v184
    %234 = vmatmul.bf16.gmra.mxu0 %v221
    %v235 = vpop.f32.mrf.mxu0
    %v236 = vadd.f32 %v193, %v235
    %v237 = vpop.f32.mrf.mxu0
    %v238 = vadd.f32 %v198, %v237
    %239 = vmatmul.bf16.gmra.mxu0 %v224
    %v240 = vpop.f32.mrf.mxu0
    %v241 = vadd.f32 %v203, %v240
    %v242 = vpop.f32.mrf.mxu0
    %v243 = vadd.f32 %v208, %v242
    %244 = vdwg.mxu0
    %v245 = vmax.f32 %v236, 0.0
    %v246 = vmax.f32 %v238, 0.0
    %v247 = vmax.f32 %v241, 0.0
    %v248 = vmax.f32 %v243, 0.0
    %v249 = vld [vmem:[%s6] sm:$0x3]
    %v250 = vpack.c.bf16 %v246, %v245
    %v251 = vpack.c.bf16 %v248, %v247
    %v252 = vld [vmem:[%s7] sm:$0xf]
    %254 = vset.pattern.permute.xlu0 0
    %255 = vperm.xlu0 %254, %v252
    %v256 = vpop.permute.xlu0 %255
    %v259 = vsel %vm150, %v249, 0
    %261 = vmatpush.bf16.msra.mxu0 0
    %262 = vmatpush.bf16.msra.mxu0 0
    %263 = vmatpush.bf16.msra.mxu0 0
    %264 = vmatpush.bf16.msra.mxu0 0
    %265 = vmatpush.bf16.msra.mxu0 0
    %266 = vmatpush.bf16.msra.mxu0 0
    %267 = vmatpush.bf16.msra.mxu0 %v251
    %268 = vmatpush.bf16.msra.mxu0 %v250
    %269 = vmatmul.bf16.gmra.mxu0 %v259
    %v270 = vpop.f32.mrf.mxu0
    %v271 = vadd.f32 %v256, %v270
    %v272 = vpop.f32.mrf.mxu0
    %273 = vdwg.mxu0
    %274 = vst [vmem:[#allocation2] sm:$0xf] %v271
    // Predicated region
    $region34: #{tpu_custom_call.1} parent=1 // pred_check
      _
    $region35: #{tpu_custom_call.1} parent=1 // pred_check_branch
      %276 = sbr.rel (0) target = $region37
    $region36: #{tpu_custom_call.1} parent=1 // pred_region
      %278 = vsyncadd [#allocation3], 0
      %s280 = sshll.u32 [#allocation2], 4
      %s281 = int_to_ptr.vmem [resolvable:$true] %s280
      %s282 = sshll.u32 %s8, 4
      %s283 = int_to_ptr.hbm [resolvable:$true] %s282
      %285 = dma.vmem_to_hbm [thread:$0]  %s281, 64, %s283, [#allocation3]
    $region37: #{tpu_custom_call.1} parent=1 // pred_fallthru
      _
    // Predicated region
    $region38: #{tpu_custom_call.1} parent=1 // pred_check
      _
    $region39: #{tpu_custom_call.1} parent=1 // pred_check_branch
      %287 = sbr.rel (0) target = $region41
    $region40: #{tpu_custom_call.1} parent=1 // pred_region
      %289 = dma.done [#allocation3], 64
    $region41: #{tpu_custom_call.1} parent=1 // pred_fallthru
      _
    %290 = vsyncpa [#allocation3], 1

</llo_original>
